<compile_context>
chip_gen: v7x
topology: tpu7x:2x2x1
jax: 0.10.0
libtpu: 0.0.40
codegen_flags: <defaults>
</compile_context>

<pallas_src>
import functools

import jax
import jax.numpy as jnp
from jax.experimental import pallas as pl
from jax.experimental.pallas import tpu as pltpu


# ----------------------------------------------------------------------------
# Pallas kernel: partial token importance for one (batch, query-tile) step.
# ----------------------------------------------------------------------------
def _importance_kernel(x_ref, wq_ref, k_ref, cos_ref, sin_ref, imp_ref,
                       qrot_ref, *, num_q, num_kv, head_dim, q_block,
                       bf16_softmax):
    """
    x_ref:    (1, tq, D)          query-tile embeddings (bf16)
    wq_ref:   (D, num_q*hd)       q projection weight (bf16, pre-transposed)
    k_ref:    (1, L, num_kv*hd)   pre-roped K for this batch element (bf16)
    cos_ref:  (tq, hd//2)         rotary cos for this query tile (f32)
    sin_ref:  (tq, hd//2)         rotary sin for this query tile (f32)
    imp_ref:  (1, 1, 1, L)        partial importance output (f32)
    qrot_ref: (tq, hd)            VMEM scratch: roped q head (bf16)
    """
    expand = num_q // num_kv
    half = head_dim // 2
    L = k_ref.shape[1]              # true (unpadded) sequence length
    tq = q_block
    qi = pl.program_id(1)

    # Q projection for this tile: bf16 operands, f32 accumulation on the MXU.
    q = jnp.dot(x_ref[0], wq_ref[...], preferred_element_type=jnp.float32)
    cq = cos_ref[...]               # (tq, half) f32
    sq = sin_ref[...]

    # Rows past the true sequence length (host-side padding) contribute 0.
    row = qi * tq + jax.lax.broadcasted_iota(jnp.int32, (tq, 1), 0)
    valid = (row < L).astype(jnp.float32)

    contrib = jnp.zeros((1, L), jnp.float32)
    # num_q is small (<= 16 for Gemma); static loop keeps the MXU fed.
    for h in range(num_q):
        c0 = h * head_dim
        kc0 = (h // expand) * head_dim          # repeat_interleave semantics
        q1 = q[:, c0:c0 + half]
        q2 = q[:, c0 + half:c0 + head_dim]
        # rope(v) = [v1*c - v2*s, v2*c + v1*s]  (cos/sin halves are equal).
        # Both halves are written contiguously so the score matmul is one
        # head_dim-deep MXU contraction instead of two half-width ones.
        qrot_ref[:, :half] = (q1 * cq - q2 * sq).astype(jnp.bfloat16)
        qrot_ref[:, half:] = (q2 * cq + q1 * sq).astype(jnp.bfloat16)
        k_head = k_ref[0, :, kc0:kc0 + head_dim]        # (L, hd) bf16
        # scores = rope(q) @ rope(k)^T.  Reference applies NO causal mask and
        # NO 1/sqrt(head_dim) scale.
        s = jax.lax.dot_general(qrot_ref[...], k_head,
                                (((1,), (1,)), ((), ())),
                                preferred_element_type=jnp.float32)  # (tq, L)
        s = s - jnp.max(s, axis=-1, keepdims=True)
        if bf16_softmax:
            # exp is the saturating EUP slot on v6e/v7x; bf16 doubles its
            # throughput.  Keep the reduction / normalization in f32.
            p = jnp.exp(s.astype(jnp.bfloat16))
        else:
            p = jnp.exp(s)
        denom = jnp.sum(p.astype(jnp.float32), axis=-1, keepdims=True)
        inv = pl.reciprocal(denom, approx=True) * valid          # (tq, 1)
        contrib = contrib + jnp.sum(p * inv, axis=0, keepdims=True)

    # This tile's share of mean-over-heads and mean-over-(true)-query-rows.
    imp_ref[0, 0] = contrib * (1.0 / (num_q * L))


# ----------------------------------------------------------------------------
# Host-side helpers.
# ----------------------------------------------------------------------------
def _round_up(x, m):
    return ((x + m - 1) // m) * m


def _query_tile(L, q_block):
    """Query-tile size: multiple of 8 (sublane), no bigger than padded L."""
    q_block = max(8, _round_up(q_block, 8))
    return min(q_block, _round_up(L, 8))


def _rope_full(v, cos_h, sin_h, n_heads, head_dim):
    """Apply rotary embedding.  v: [B, L, n_heads*hd] (f32)."""
    B, L, _ = v.shape
    half = head_dim // 2
    v = v.reshape(B, L, n_heads, head_dim)
    v1, v2 = v[..., :half], v[..., half:]
    c = cos_h.astype(v.dtype)[None, :, None, :]
    s = sin_h.astype(v.dtype)[None, :, None, :]
    out = jnp.concatenate([v1 * c - v2 * s, v2 * c + v1 * s], axis=-1)
    return out.reshape(B, L, n_heads * head_dim)


def token_importance(embs, wq, wk, cos_h, sin_h, *, num_q, num_kv, head_dim,
                     q_block=128, bf16_softmax=True):
    """embs: [B, L, D] bf16 -> per-token importance [B, L] (float32).

    q_block: query-tile rows (128 default; 256 is fine on v5e/v6e if VMEM
    allows, 128 preferred on v7x).  bf16_softmax: set False on v5e.
    """
    assert num_q % num_kv == 0 and head_dim % 2 == 0
    B, L, D = embs.shape
    half = head_dim // 2
    tq = _query_tile(L, q_block)
    n_qt = (L + tq - 1) // tq
    L_pad = n_qt * tq

    # K projection + RoPE outside the kernel (small matmul, handled by XLA).
    k = jax.lax.dot_general(embs, wk, (((2,), (0,)), ((), ())),
                            preferred_element_type=jnp.float32)
    k_roped = _rope_full(k, cos_h, sin_h, num_kv, head_dim).astype(jnp.bfloat16)

    # Pad the query-side arrays along L to a multiple of tq (masked in-kernel).
    if L_pad != L:
        embs_q = jnp.pad(embs, [(0, 0), (0, L_pad - L), (0, 0)])
        cos_q = jnp.pad(cos_h, [(0, L_pad - L), (0, 0)])
        sin_q = jnp.pad(sin_h, [(0, L_pad - L), (0, 0)])
    else:
        embs_q, cos_q, sin_q = embs, cos_h, sin_h
    cos_q = cos_q.astype(jnp.float32)
    sin_q = sin_q.astype(jnp.float32)

    kernel = functools.partial(_importance_kernel, num_q=num_q, num_kv=num_kv,
                               head_dim=head_dim, q_block=tq,
                               bf16_softmax=bf16_softmax)

    # Explicit VMEM budget: x tiles + wq + roped-K slab + cos/sin + output +
    # scratch + softmax temporaries, with headroom.
    vmem_bytes = (
        2 * tq * D * 2                      # x tiles (double-buffered)
        + D * num_q * head_dim * 2          # wq (single-buffered)
        + 2 * L * num_kv * head_dim * 2     # roped K (double-buffered)
        + 2 * 2 * tq * half * 4             # cos/sin tiles
        + 2 * L * 4                         # output tiles
        + tq * head_dim * 2                 # qrot scratch
        + 4 * tq * L * 4                    # softmax temporaries (s, p, p*inv)
    )
    vmem_limit = max(16 << 20, min(int(vmem_bytes * 1.25) + (2 << 20), 64 << 20))

    out = pl.pallas_call(
        kernel,
        out_shape=jax.ShapeDtypeStruct((B, n_qt, 1, L), jnp.float32),
        grid=(B, n_qt),
        in_specs=[
            pl.BlockSpec((1, tq, D), lambda b, qi: (b, qi, 0)),
            # wq never changes across the grid -> single-buffered.
            pl.BlockSpec((D, num_q * head_dim), lambda b, qi: (0, 0),
                         pipeline_mode=pl.Buffered(1)),
            pl.BlockSpec((1, L, num_kv * head_dim), lambda b, qi: (b, 0, 0)),
            pl.BlockSpec((tq, half), lambda b, qi: (qi, 0)),
            pl.BlockSpec((tq, half), lambda b, qi: (qi, 0)),
        ],
        out_specs=pl.BlockSpec((1, 1, 1, L), lambda b, qi: (b, qi, 0, 0)),
        scratch_shapes=[
            pltpu.VMEM((tq, head_dim), jnp.bfloat16),   # roped q head scratch
        ],
        compiler_params=pltpu.CompilerParams(
            dimension_semantics=("parallel", "parallel"),
            vmem_limit_bytes=vmem_limit),
    )(embs_q, wq, k_roped, cos_q, sin_q)

    # Reduce the per-tile partials -> per-token importance.
    return jnp.sum(out[:, :, 0, :], axis=1)


def _reference_importance(embs, wq, wk, cos_h, sin_h, *, num_q, num_kv,
                          head_dim):
    """Pure-JAX f32 replica of GemmaAttentionWeightsOnly + mean over h,q."""
    B, L, _ = embs.shape
    half = head_dim // 2
    x = embs.astype(jnp.float32)
    q = (x @ wq.astype(jnp.float32)).reshape(B, L, num_q, head_dim)
    k = (x @ wk.astype(jnp.float32)).reshape(B, L, num_kv, head_dim)
    q = q.transpose(0, 2, 1, 3)
    k = k.transpose(0, 2, 1, 3)
    cos = jnp.concatenate([cos_h, cos_h], axis=-1)[None, None].astype(jnp.float32)
    sin = jnp.concatenate([sin_h, sin_h], axis=-1)[None, None].astype(jnp.float32)

    def rot_half(v):
        v1, v2 = v[..., :half], v[..., half:]
        return jnp.concatenate([-v2, v1], axis=-1)

    q = q * cos + rot_half(q) * sin
    k = k * cos + rot_half(k) * sin
    k = jnp.repeat(k, num_q // num_kv, axis=1)
    scores = jnp.einsum('bhqd,bhkd->bhqk', q, k)
    attn = jax.nn.softmax(scores, axis=-1)
    return attn.mean(axis=1).mean(axis=1)   # [B, L]


class TokenPrunerPallas:
    """JAX/Pallas port of TokenPruner with synthetic deterministic weights."""

    def __init__(self, *, vocab_size, hidden, num_q, num_kv, head_dim,
                 compression_ratio, rope_base=10000.0, q_block=128,
                 bf16_softmax=True, key=None):
        self.vocab_size = vocab_size
        self.hidden = hidden
        self.num_q = num_q
        self.num_kv = num_kv
        self.head_dim = head_dim
        self.compression_ratio = compression_ratio
        self.rope_base = rope_base
        self.q_block = q_block
        self.bf16_softmax = bf16_softmax

        key = key if key is not None else jax.random.PRNGKey(0)
        k_emb, k_q, k_k = jax.random.split(key, 3)
        scale = 0.02
        self.embeddings = (scale * jax.random.normal(
            k_emb, (vocab_size, hidden), jnp.float32)).astype(jnp.bfloat16)
        # Stored pre-transposed: [D, out_features].
        self.wq = (scale * jax.random.normal(
            k_q, (hidden, num_q * head_dim), jnp.float32)).astype(jnp.bfloat16)
        self.wk = (scale * jax.random.normal(
            k_k, (hidden, num_kv * head_dim), jnp.float32)).astype(jnp.bfloat16)

    def _rotary(self, L):
        """Unique rotary half-tables: cos/sin of shape [L, head_dim//2] f32."""
        hd = self.head_dim
        inv_freq = 1.0 / (self.rope_base ** (
            jnp.arange(0, hd, 2, dtype=jnp.float32) / hd))
        pos = jnp.arange(L, dtype=jnp.float32)
        freqs = pos[:, None] * inv_freq[None, :]
        return jnp.cos(freqs), jnp.sin(freqs)

    def __call__(self, input_ids):
        B, L = input_ids.shape
        embs = self.embeddings[input_ids]                 # [B, L, D] bf16
        cos_h, sin_h = self._rotary(L)

        importance = token_importance(
            embs, self.wq, self.wk, cos_h, sin_h,
            num_q=self.num_q, num_kv=self.num_kv, head_dim=self.head_dim,
            q_block=self.q_block, bf16_softmax=self.bf16_softmax)

        k = max(int(L * self.compression_ratio), 2)
        _, topk = jax.lax.top_k(importance, k)
        topk = jnp.sort(topk, axis=-1)
        need_append = topk[:, -1] != L - 1
        # TODO(synk): host-side data-dependent branch mirrors PyTorch exactly
        # (appends L-1 for ALL rows when any row misses it); not jit-traceable.
        if bool(jnp.any(need_append)):
            last = jnp.full((B, 1), L - 1, dtype=topk.dtype)
            topk = jnp.concatenate([topk, last], axis=1)
        pruned_ids = jnp.take_along_axis(input_ids, topk, axis=1)
        return pruned_ids, topk


if __name__ == "__main__":
    B, L = 2, 16
    hidden = 32
    head_dim = 8
    num_q, num_kv = 4, 2
    vocab = 64
    ratio = 0.5

    key = jax.random.PRNGKey(0)
    k_param, k_ids, k_ids2 = jax.random.split(key, 3)

    pruner = TokenPrunerPallas(
        vocab_size=vocab, hidden=hidden, num_q=num_q, num_kv=num_kv,
        head_dim=head_dim, compression_ratio=ratio, q_block=8, key=k_param)

    input_ids = jax.random.randint(k_ids, (B, L), 0, vocab, dtype=jnp.int32)

    # --- kernel sanity check on 2 query tiles (L divisible by tq) ---
    embs = pruner.embeddings[input_ids]
    cos_h, sin_h = pruner._rotary(L)
    imp = token_importance(embs, pruner.wq, pruner.wk, cos_h, sin_h,
                           num_q=num_q, num_kv=num_kv, head_dim=head_dim,
                           q_block=8)
    jax.block_until_ready(imp)
    assert imp.shape == (B, L)
    row_sum = jnp.sum(imp, axis=-1)          # mean of softmax rows -> ~1
    assert bool(jnp.all(jnp.abs(row_sum - 1.0) < 2e-2)), row_sum
    imp_ref = _reference_importance(embs, pruner.wq, pruner.wk, cos_h, sin_h,
                                    num_q=num_q, num_kv=num_kv,
                                    head_dim=head_dim)
    assert bool(jnp.all(jnp.abs(imp - imp_ref) < 5e-3))

    # --- exercise the padded / masked query-tile path (L not multiple of tq) ---
    L2 = 12
    ids2 = jax.random.randint(k_ids2, (B, L2), 0, vocab, dtype=jnp.int32)
    embs2 = pruner.embeddings[ids2]
    cos2, sin2 = pruner._rotary(L2)
    imp2 = token_importance(embs2, pruner.wq, pruner.wk, cos2, sin2,
                            num_q=num_q, num_kv=num_kv, head_dim=head_dim,
                            q_block=8)
    jax.block_until_ready(imp2)
    ref2 = _reference_importance(embs2, pruner.wq, pruner.wk, cos2, sin2,
                                 num_q=num_q, num_kv=num_kv,
                                 head_dim=head_dim)
    assert imp2.shape == (B, L2)
    assert bool(jnp.all(jnp.abs(imp2 - ref2) < 5e-3))

    # --- full pruner forward ---
    pruned_ids, keep_idx = pruner(input_ids)
    jax.block_until_ready((pruned_ids, keep_idx))
    assert pruned_ids.shape == keep_idx.shape
    assert pruned_ids.shape[0] == B
    print("KERNEL_OK")
</pallas_src>

<mosaic_0001>
module attributes {stable_mosaic.version = 11 : i64} {
  func.func @_importance_kernel(%arg0: i32, %arg1: i32, %arg2: memref<1x8x32xbf16, #tpu.memory_space<vmem>>, %arg3: memref<32x32xbf16, #tpu.memory_space<vmem>>, %arg4: memref<1x16x16xbf16, #tpu.memory_space<vmem>>, %arg5: memref<8x4xf32, #tpu.memory_space<vmem>>, %arg6: memref<8x4xf32, #tpu.memory_space<vmem>>, %arg7: memref<1x1x1x16xf32, #tpu.memory_space<vmem>>, %arg8: memref<8x8xbf16, #tpu.memory_space<vmem>>) attributes {dimension_semantics = [#tpu.dimension_semantics<parallel>, #tpu.dimension_semantics<parallel>], iteration_bounds = array<i64: 2, 2>, scalar_prefetch = 0 : i64, scratch_operands = 1 : i64, tpu.core_type = #tpu.core_type<tc>, window_params = [{transform_indices = @transform_0, window_bounds = array<i64: 1, 8, 32>}, {pipeline_mode = #tpu.pipeline_mode<synchronous>, transform_indices = @transform_1, window_bounds = array<i64: 32, 32>}, {transform_indices = @transform_2, window_bounds = array<i64: 1, 16, 16>}, {transform_indices = @transform_3, window_bounds = array<i64: 8, 4>}, {transform_indices = @transform_4, window_bounds = array<i64: 8, 4>}, {transform_indices = @transform_5, window_bounds = array<i64: 1, 1, 1, 16>}]} {
    %c0 = arith.constant 0 : index
    %c0_0 = arith.constant 0 : index
    %c0_1 = arith.constant 0 : index
    %0 = vector.load %arg2[%c0, %c0_0, %c0_1] : memref<1x8x32xbf16, #tpu.memory_space<vmem>>, vector<1x8x32xbf16>
    %1 = vector.shape_cast %0 : vector<1x8x32xbf16> to vector<8x32xbf16>
    %c0_2 = arith.constant 0 : index
    %c0_3 = arith.constant 0 : index
    %2 = vector.load %arg3[%c0_2, %c0_3] : memref<32x32xbf16, #tpu.memory_space<vmem>>, vector<32x32xbf16>
    %cst = arith.constant dense<0.000000e+00> : vector<8x32xf32>
    %3 = tpu.matmul %1, %2, %cst {dimension_numbers = #tpu.dot_dimension_numbers<[1], [0], [0], [1], [0, 0, 1, 1], [], []>} : vector<8x32xbf16>, vector<32x32xbf16>, vector<8x32xf32> -> vector<8x32xf32>
    %c0_4 = arith.constant 0 : index
    %c0_5 = arith.constant 0 : index
    %4 = vector.load %arg5[%c0_4, %c0_5] : memref<8x4xf32, #tpu.memory_space<vmem>>, vector<8x4xf32>
    %c0_6 = arith.constant 0 : index
    %c0_7 = arith.constant 0 : index
    %5 = vector.load %arg6[%c0_6, %c0_7] : memref<8x4xf32, #tpu.memory_space<vmem>>, vector<8x4xf32>
    %c8_i32 = arith.constant 8 : i32
    %6 = arith.muli %arg1, %c8_i32 : i32
    %7 = tpu.iota {dimensions = array<i32: 0>} : vector<8x1xi32>
    %8 = vector.broadcast %6 : i32 to vector<8x1xi32>
    %9 = arith.addi %8, %7 : vector<8x1xi32>
    %c16_i32 = arith.constant 16 : i32
    %10 = vector.broadcast %c16_i32 : i32 to vector<8x1xi32>
    %11 = arith.cmpi slt, %9, %10 : vector<8x1xi32>
    %12 = arith.extui %11 : vector<8x1xi1> to vector<8x1xi32>
    %13 = arith.sitofp %12 : vector<8x1xi32> to vector<8x1xf32>
    %cst_8 = arith.constant 0.000000e+00 : f32
    %14 = vector.broadcast %cst_8 : f32 to vector<1x16xf32>
    %15 = vector.extract_strided_slice %3 {offsets = [0, 0], sizes = [8, 4], strides = [1, 1]} : vector<8x32xf32> to vector<8x4xf32>
    %16 = vector.extract_strided_slice %3 {offsets = [0, 4], sizes = [8, 4], strides = [1, 1]} : vector<8x32xf32> to vector<8x4xf32>
    %17 = arith.mulf %15, %4 : vector<8x4xf32>
    %18 = arith.mulf %16, %5 : vector<8x4xf32>
    %19 = arith.subf %17, %18 : vector<8x4xf32>
    %20 = arith.truncf %19 : vector<8x4xf32> to vector<8x4xbf16>
    %c0_9 = arith.constant 0 : index
    %c0_10 = arith.constant 0 : index
    %21 = vector.load %arg8[%c0_9, %c0_10] : memref<8x8xbf16, #tpu.memory_space<vmem>>, vector<8x4xbf16>
    tpu.vector_store %arg8[%c0_9, %c0_10], %20 {strides = array<i32>} : memref<8x8xbf16, #tpu.memory_space<vmem>>, vector<8x4xbf16>,
    %22 = arith.mulf %16, %4 : vector<8x4xf32>
    %23 = arith.mulf %15, %5 : vector<8x4xf32>
    %24 = arith.addf %22, %23 : vector<8x4xf32>
    %25 = arith.truncf %24 : vector<8x4xf32> to vector<8x4xbf16>
    %c0_11 = arith.constant 0 : index
    %c4 = arith.constant 4 : index
    %26 = vector.load %arg8[%c0_11, %c4] : memref<8x8xbf16, #tpu.memory_space<vmem>>, vector<8x4xbf16>
    tpu.vector_store %arg8[%c0_11, %c4], %25 {strides = array<i32>} : memref<8x8xbf16, #tpu.memory_space<vmem>>, vector<8x4xbf16>,
    %c0_12 = arith.constant 0 : index
    %c0_13 = arith.constant 0 : index
    %c0_14 = arith.constant 0 : index
    %27 = vector.load %arg4[%c0_12, %c0_13, %c0_14] : memref<1x16x16xbf16, #tpu.memory_space<vmem>>, vector<1x16x8xbf16>
    %28 = vector.shape_cast %27 : vector<1x16x8xbf16> to vector<16x8xbf16>
    %c0_15 = arith.constant 0 : index
    %c0_16 = arith.constant 0 : index
    %29 = vector.load %arg8[%c0_15, %c0_16] : memref<8x8xbf16, #tpu.memory_space<vmem>>, vector<8x8xbf16>
    %cst_17 = arith.constant dense<0.000000e+00> : vector<8x16xf32>
    %30 = tpu.matmul %29, %28, %cst_17 {dimension_numbers = #tpu.dot_dimension_numbers<[1], [1], [0], [0], [0, 0, 1, 0], [], []>} : vector<8x8xbf16>, vector<16x8xbf16>, vector<8x16xf32> -> vector<8x16xf32>
    %cst_18 = arith.constant dense<0xFF800000> : vector<8xf32>
    %31 = vector.multi_reduction <maximumf>, %30, %cst_18 [1] : vector<8x16xf32> to vector<8xf32>
    %32 = vector.shape_cast %31 : vector<8xf32> to vector<8x1xf32>
    %33 = vector.broadcast %32 : vector<8x1xf32> to vector<8x16xf32>
    %34 = arith.subf %30, %33 : vector<8x16xf32>
    %35 = arith.truncf %34 : vector<8x16xf32> to vector<8x16xbf16>
    %36 = math.exp %35 : vector<8x16xbf16>
    %37 = arith.extf %36 : vector<8x16xbf16> to vector<8x16xf32>
    %cst_19 = arith.constant dense<0.000000e+00> : vector<8xf32>
    %38 = vector.multi_reduction <add>, %37, %cst_19 [1] : vector<8x16xf32> to vector<8xf32>
    %39 = vector.shape_cast %38 : vector<8xf32> to vector<8x1xf32>
    %40 = tpu.reciprocal %39 {approx = true} : vector<8x1xf32> -> vector<8x1xf32>
    %41 = arith.mulf %40, %13 : vector<8x1xf32>
    %42 = arith.extf %36 : vector<8x16xbf16> to vector<8x16xf32>
    %43 = vector.broadcast %41 : vector<8x1xf32> to vector<8x16xf32>
    %44 = arith.mulf %42, %43 : vector<8x16xf32>
    %cst_20 = arith.constant dense<0.000000e+00> : vector<16xf32>
    %45 = vector.multi_reduction <add>, %44, %cst_20 [0] : vector<8x16xf32> to vector<16xf32>
    %46 = vector.shape_cast %45 : vector<16xf32> to vector<1x16xf32>
    %47 = arith.addf %14, %46 : vector<1x16xf32>
    %48 = vector.extract_strided_slice %3 {offsets = [0, 8], sizes = [8, 4], strides = [1, 1]} : vector<8x32xf32> to vector<8x4xf32>
    %49 = vector.extract_strided_slice %3 {offsets = [0, 12], sizes = [8, 4], strides = [1, 1]} : vector<8x32xf32> to vector<8x4xf32>
    %50 = arith.mulf %48, %4 : vector<8x4xf32>
    %51 = arith.mulf %49, %5 : vector<8x4xf32>
    %52 = arith.subf %50, %51 : vector<8x4xf32>
    %53 = arith.truncf %52 : vector<8x4xf32> to vector<8x4xbf16>
    %c0_21 = arith.constant 0 : index
    %c0_22 = arith.constant 0 : index
    %54 = vector.load %arg8[%c0_21, %c0_22] : memref<8x8xbf16, #tpu.memory_space<vmem>>, vector<8x4xbf16>
    tpu.vector_store %arg8[%c0_21, %c0_22], %53 {strides = array<i32>} : memref<8x8xbf16, #tpu.memory_space<vmem>>, vector<8x4xbf16>,
    %55 = arith.mulf %49, %4 : vector<8x4xf32>
    %56 = arith.mulf %48, %5 : vector<8x4xf32>
    %57 = arith.addf %55, %56 : vector<8x4xf32>
    %58 = arith.truncf %57 : vector<8x4xf32> to vector<8x4xbf16>
    %c0_23 = arith.constant 0 : index
    %c4_24 = arith.constant 4 : index
    %59 = vector.load %arg8[%c0_23, %c4_24] : memref<8x8xbf16, #tpu.memory_space<vmem>>, vector<8x4xbf16>
    tpu.vector_store %arg8[%c0_23, %c4_24], %58 {strides = array<i32>} : memref<8x8xbf16, #tpu.memory_space<vmem>>, vector<8x4xbf16>,
    %c0_25 = arith.constant 0 : index
    %c0_26 = arith.constant 0 : index
    %c0_27 = arith.constant 0 : index
    %60 = vector.load %arg4[%c0_25, %c0_26, %c0_27] : memref<1x16x16xbf16, #tpu.memory_space<vmem>>, vector<1x16x8xbf16>
    %61 = vector.shape_cast %60 : vector<1x16x8xbf16> to vector<16x8xbf16>
    %c0_28 = arith.constant 0 : index
    %c0_29 = arith.constant 0 : index
    %62 = vector.load %arg8[%c0_28, %c0_29] : memref<8x8xbf16, #tpu.memory_space<vmem>>, vector<8x8xbf16>
    %cst_30 = arith.constant dense<0.000000e+00> : vector<8x16xf32>
    %63 = tpu.matmul %62, %61, %cst_30 {dimension_numbers = #tpu.dot_dimension_numbers<[1], [1], [0], [0], [0, 0, 1, 0], [], []>} : vector<8x8xbf16>, vector<16x8xbf16>, vector<8x16xf32> -> vector<8x16xf32>
    %cst_31 = arith.constant dense<0xFF800000> : vector<8xf32>
    %64 = vector.multi_reduction <maximumf>, %63, %cst_31 [1] : vector<8x16xf32> to vector<8xf32>
    %65 = vector.shape_cast %64 : vector<8xf32> to vector<8x1xf32>
    %66 = vector.broadcast %65 : vector<8x1xf32> to vector<8x16xf32>
    %67 = arith.subf %63, %66 : vector<8x16xf32>
    %68 = arith.truncf %67 : vector<8x16xf32> to vector<8x16xbf16>
    %69 = math.exp %68 : vector<8x16xbf16>
    %70 = arith.extf %69 : vector<8x16xbf16> to vector<8x16xf32>
    %cst_32 = arith.constant dense<0.000000e+00> : vector<8xf32>
    %71 = vector.multi_reduction <add>, %70, %cst_32 [1] : vector<8x16xf32> to vector<8xf32>
    %72 = vector.shape_cast %71 : vector<8xf32> to vector<8x1xf32>
    %73 = tpu.reciprocal %72 {approx = true} : vector<8x1xf32> -> vector<8x1xf32>
    %74 = arith.mulf %73, %13 : vector<8x1xf32>
    %75 = arith.extf %69 : vector<8x16xbf16> to vector<8x16xf32>
    %76 = vector.broadcast %74 : vector<8x1xf32> to vector<8x16xf32>
    %77 = arith.mulf %75, %76 : vector<8x16xf32>
    %cst_33 = arith.constant dense<0.000000e+00> : vector<16xf32>
    %78 = vector.multi_reduction <add>, %77, %cst_33 [0] : vector<8x16xf32> to vector<16xf32>
    %79 = vector.shape_cast %78 : vector<16xf32> to vector<1x16xf32>
    %80 = arith.addf %47, %79 : vector<1x16xf32>
    %81 = vector.extract_strided_slice %3 {offsets = [0, 16], sizes = [8, 4], strides = [1, 1]} : vector<8x32xf32> to vector<8x4xf32>
    %82 = vector.extract_strided_slice %3 {offsets = [0, 20], sizes = [8, 4], strides = [1, 1]} : vector<8x32xf32> to vector<8x4xf32>
    %83 = arith.mulf %81, %4 : vector<8x4xf32>
    %84 = arith.mulf %82, %5 : vector<8x4xf32>
    %85 = arith.subf %83, %84 : vector<8x4xf32>
    %86 = arith.truncf %85 : vector<8x4xf32> to vector<8x4xbf16>
    %c0_34 = arith.constant 0 : index
    %c0_35 = arith.constant 0 : index
    %87 = vector.load %arg8[%c0_34, %c0_35] : memref<8x8xbf16, #tpu.memory_space<vmem>>, vector<8x4xbf16>
    tpu.vector_store %arg8[%c0_34, %c0_35], %86 {strides = array<i32>} : memref<8x8xbf16, #tpu.memory_space<vmem>>, vector<8x4xbf16>,
    %88 = arith.mulf %82, %4 : vector<8x4xf32>
    %89 = arith.mulf %81, %5 : vector<8x4xf32>
    %90 = arith.addf %88, %89 : vector<8x4xf32>
    %91 = arith.truncf %90 : vector<8x4xf32> to vector<8x4xbf16>
    %c0_36 = arith.constant 0 : index
    %c4_37 = arith.constant 4 : index
    %92 = vector.load %arg8[%c0_36, %c4_37] : memref<8x8xbf16, #tpu.memory_space<vmem>>, vector<8x4xbf16>
    tpu.vector_store %arg8[%c0_36, %c4_37], %91 {strides = array<i32>} : memref<8x8xbf16, #tpu.memory_space<vmem>>, vector<8x4xbf16>,
    %c0_38 = arith.constant 0 : index
    %c0_39 = arith.constant 0 : index
    %c8 = arith.constant 8 : index
    %93 = vector.load %arg4[%c0_38, %c0_39, %c8] : memref<1x16x16xbf16, #tpu.memory_space<vmem>>, vector<1x16x8xbf16>
    %94 = vector.shape_cast %93 : vector<1x16x8xbf16> to vector<16x8xbf16>
    %c0_40 = arith.constant 0 : index
    %c0_41 = arith.constant 0 : index
    %95 = vector.load %arg8[%c0_40, %c0_41] : memref<8x8xbf16, #tpu.memory_space<vmem>>, vector<8x8xbf16>
    %cst_42 = arith.constant dense<0.000000e+00> : vector<8x16xf32>
    %96 = tpu.matmul %95, %94, %cst_42 {dimension_numbers = #tpu.dot_dimension_numbers<[1], [1], [0], [0], [0, 0, 1, 0], [], []>} : vector<8x8xbf16>, vector<16x8xbf16>, vector<8x16xf32> -> vector<8x16xf32>
    %cst_43 = arith.constant dense<0xFF800000> : vector<8xf32>
    %97 = vector.multi_reduction <maximumf>, %96, %cst_43 [1] : vector<8x16xf32> to vector<8xf32>
    %98 = vector.shape_cast %97 : vector<8xf32> to vector<8x1xf32>
    %99 = vector.broadcast %98 : vector<8x1xf32> to vector<8x16xf32>
    %100 = arith.subf %96, %99 : vector<8x16xf32>
    %101 = arith.truncf %100 : vector<8x16xf32> to vector<8x16xbf16>
    %102 = math.exp %101 : vector<8x16xbf16>
    %103 = arith.extf %102 : vector<8x16xbf16> to vector<8x16xf32>
    %cst_44 = arith.constant dense<0.000000e+00> : vector<8xf32>
    %104 = vector.multi_reduction <add>, %103, %cst_44 [1] : vector<8x16xf32> to vector<8xf32>
    %105 = vector.shape_cast %104 : vector<8xf32> to vector<8x1xf32>
    %106 = tpu.reciprocal %105 {approx = true} : vector<8x1xf32> -> vector<8x1xf32>
    %107 = arith.mulf %106, %13 : vector<8x1xf32>
    %108 = arith.extf %102 : vector<8x16xbf16> to vector<8x16xf32>
    %109 = vector.broadcast %107 : vector<8x1xf32> to vector<8x16xf32>
    %110 = arith.mulf %108, %109 : vector<8x16xf32>
    %cst_45 = arith.constant dense<0.000000e+00> : vector<16xf32>
    %111 = vector.multi_reduction <add>, %110, %cst_45 [0] : vector<8x16xf32> to vector<16xf32>
    %112 = vector.shape_cast %111 : vector<16xf32> to vector<1x16xf32>
    %113 = arith.addf %80, %112 : vector<1x16xf32>
    %114 = vector.extract_strided_slice %3 {offsets = [0, 24], sizes = [8, 4], strides = [1, 1]} : vector<8x32xf32> to vector<8x4xf32>
    %115 = vector.extract_strided_slice %3 {offsets = [0, 28], sizes = [8, 4], strides = [1, 1]} : vector<8x32xf32> to vector<8x4xf32>
    %116 = arith.mulf %114, %4 : vector<8x4xf32>
    %117 = arith.mulf %115, %5 : vector<8x4xf32>
    %118 = arith.subf %116, %117 : vector<8x4xf32>
    %119 = arith.truncf %118 : vector<8x4xf32> to vector<8x4xbf16>
    %c0_46 = arith.constant 0 : index
    %c0_47 = arith.constant 0 : index
    %120 = vector.load %arg8[%c0_46, %c0_47] : memref<8x8xbf16, #tpu.memory_space<vmem>>, vector<8x4xbf16>
    tpu.vector_store %arg8[%c0_46, %c0_47], %119 {strides = array<i32>} : memref<8x8xbf16, #tpu.memory_space<vmem>>, vector<8x4xbf16>,
    %121 = arith.mulf %115, %4 : vector<8x4xf32>
    %122 = arith.mulf %114, %5 : vector<8x4xf32>
    %123 = arith.addf %121, %122 : vector<8x4xf32>
    %124 = arith.truncf %123 : vector<8x4xf32> to vector<8x4xbf16>
    %c0_48 = arith.constant 0 : index
    %c4_49 = arith.constant 4 : index
    %125 = vector.load %arg8[%c0_48, %c4_49] : memref<8x8xbf16, #tpu.memory_space<vmem>>, vector<8x4xbf16>
    tpu.vector_store %arg8[%c0_48, %c4_49], %124 {strides = array<i32>} : memref<8x8xbf16, #tpu.memory_space<vmem>>, vector<8x4xbf16>,
    %c0_50 = arith.constant 0 : index
    %c0_51 = arith.constant 0 : index
    %c8_52 = arith.constant 8 : index
    %126 = vector.load %arg4[%c0_50, %c0_51, %c8_52] : memref<1x16x16xbf16, #tpu.memory_space<vmem>>, vector<1x16x8xbf16>
    %127 = vector.shape_cast %126 : vector<1x16x8xbf16> to vector<16x8xbf16>
    %c0_53 = arith.constant 0 : index
    %c0_54 = arith.constant 0 : index
    %128 = vector.load %arg8[%c0_53, %c0_54] : memref<8x8xbf16, #tpu.memory_space<vmem>>, vector<8x8xbf16>
    %cst_55 = arith.constant dense<0.000000e+00> : vector<8x16xf32>
    %129 = tpu.matmul %128, %127, %cst_55 {dimension_numbers = #tpu.dot_dimension_numbers<[1], [1], [0], [0], [0, 0, 1, 0], [], []>} : vector<8x8xbf16>, vector<16x8xbf16>, vector<8x16xf32> -> vector<8x16xf32>
    %cst_56 = arith.constant dense<0xFF800000> : vector<8xf32>
    %130 = vector.multi_reduction <maximumf>, %129, %cst_56 [1] : vector<8x16xf32> to vector<8xf32>
    %131 = vector.shape_cast %130 : vector<8xf32> to vector<8x1xf32>
    %132 = vector.broadcast %131 : vector<8x1xf32> to vector<8x16xf32>
    %133 = arith.subf %129, %132 : vector<8x16xf32>
    %134 = arith.truncf %133 : vector<8x16xf32> to vector<8x16xbf16>
    %135 = math.exp %134 : vector<8x16xbf16>
    %136 = arith.extf %135 : vector<8x16xbf16> to vector<8x16xf32>
    %cst_57 = arith.constant dense<0.000000e+00> : vector<8xf32>
    %137 = vector.multi_reduction <add>, %136, %cst_57 [1] : vector<8x16xf32> to vector<8xf32>
    %138 = vector.shape_cast %137 : vector<8xf32> to vector<8x1xf32>
    %139 = tpu.reciprocal %138 {approx = true} : vector<8x1xf32> -> vector<8x1xf32>
    %140 = arith.mulf %139, %13 : vector<8x1xf32>
    %141 = arith.extf %135 : vector<8x16xbf16> to vector<8x16xf32>
    %142 = vector.broadcast %140 : vector<8x1xf32> to vector<8x16xf32>
    %143 = arith.mulf %141, %142 : vector<8x16xf32>
    %cst_58 = arith.constant dense<0.000000e+00> : vector<16xf32>
    %144 = vector.multi_reduction <add>, %143, %cst_58 [0] : vector<8x16xf32> to vector<16xf32>
    %145 = vector.shape_cast %144 : vector<16xf32> to vector<1x16xf32>
    %146 = arith.addf %113, %145 : vector<1x16xf32>
    %cst_59 = arith.constant 1.562500e-02 : f32
    %147 = vector.broadcast %cst_59 : f32 to vector<1x16xf32>
    %148 = arith.mulf %146, %147 : vector<1x16xf32>
    %c0_60 = arith.constant 0 : index
    %c0_61 = arith.constant 0 : index
    %c0_62 = arith.constant 0 : index
    %c0_63 = arith.constant 0 : index
    %149 = vector.load %arg7[%c0_60, %c0_61, %c0_62, %c0_63] : memref<1x1x1x16xf32, #tpu.memory_space<vmem>>, vector<1x1x1x16xf32>
    %150 = vector.shape_cast %149 : vector<1x1x1x16xf32> to vector<1x16xf32>
    %151 = vector.shape_cast %148 : vector<1x16xf32> to vector<1x1x1x16xf32>
    tpu.vector_store %arg7[%c0_60, %c0_61, %c0_62, %c0_63], %151 {strides = array<i32>} : memref<1x1x1x16xf32, #tpu.memory_space<vmem>>, vector<1x1x1x16xf32>,
    return
  }
  func.func @transform_0(%arg0: i32, %arg1: i32) -> (i32, i32, i32) {
    %c0_i32 = arith.constant 0 : i32
    %c0_i32_0 = arith.constant 0 : i32
    return %arg0, %arg1, %c0_i32 : i32, i32, i32
  }
  func.func @transform_1(%arg0: i32, %arg1: i32) -> (i32, i32) {
    %c0_i32 = arith.constant 0 : i32
    %c0_i32_0 = arith.constant 0 : i32
    %c0_i32_1 = arith.constant 0 : i32
    return %c0_i32, %c0_i32_0 : i32, i32
  }
  func.func @transform_2(%arg0: i32, %arg1: i32) -> (i32, i32, i32) {
    %c0_i32 = arith.constant 0 : i32
    %c0_i32_0 = arith.constant 0 : i32
    %c0_i32_1 = arith.constant 0 : i32
    return %arg0, %c0_i32, %c0_i32_0 : i32, i32, i32
  }
  func.func @transform_3(%arg0: i32, %arg1: i32) -> (i32, i32) {
    %c0_i32 = arith.constant 0 : i32
    %c0_i32_0 = arith.constant 0 : i32
    return %arg1, %c0_i32 : i32, i32
  }
  func.func @transform_4(%arg0: i32, %arg1: i32) -> (i32, i32) {
    %c0_i32 = arith.constant 0 : i32
    %c0_i32_0 = arith.constant 0 : i32
    return %arg1, %c0_i32 : i32, i32
  }
  func.func @transform_5(%arg0: i32, %arg1: i32) -> (i32, i32, i32, i32) {
    %c0_i32 = arith.constant 0 : i32
    %c0_i32_0 = arith.constant 0 : i32
    %c0_i32_1 = arith.constant 0 : i32
    return %arg0, %arg1, %c0_i32, %c0_i32_0 : i32, i32, i32, i32
  }
}

</mosaic_0001>

<llo_original>
// kernel: tpu_custom_call.1
$region0: #{tpu_custom_call.1}
  #allocation0 [shape = 'u32[]', space=smem, size = 0x4, offset = 0x4, fixed_abs, tag = 'smem constant byte address 0x4 - core index']
  #allocation1 [shape = 'u32[144,128]{1,0:T(1,128)}', space=vmem, size = 0x12000, scoped, tag = 'internal scratch']
  #allocation2 [shape = 'bf16[8,8]{1,0:T(8,128)(2,1)}', space=vmem, size = 0x800, scoped, tag = 'scratch operand']
  %s0 = inlined_call_operand.vmem [shape: bf16[2,16,32], index: 0, kind: input, shape index: {}]
  %s1 = inlined_call_operand.vmem [shape: bf16[32,32], index: 1, kind: input, shape index: {}]
  %s2 = inlined_call_operand.hbm [shape: bf16[2,16,16], index: 2, kind: input, shape index: {}]
  %s3 = inlined_call_operand.vmem [shape: f32[16,4], index: 3, kind: input, shape index: {}]
  %s4 = inlined_call_operand.vmem [shape: f32[16,4], index: 4, kind: input, shape index: {}]
  %s5 = inlined_call_operand.hbm [shape: f32[2,2,1,16], index: 5, kind: output, shape index: {}]
  %s6 = sld [smem:[#allocation0]]
  $region57: #{tpu_custom_call.1} parent=0
    _
  %s8 = ssub.s32 1, %s6
  %s9 = scalar_select 0, %s8, %s6
  $region1: #{tpu_custom_call.1} parent=0
    #allocation3 [shape = 'u8[8192]{0}', space=vmem, size = 0x2000, scoped, tag = 'input window, operand 2']
    #allocation4 [shape = 's32[2]{0}', space=sflag, size = 0x8, scoped, tag = 'scoped memory for tpu_custom_call.1']
    #allocation5 [shape = 's32[2]{0}', space=sflag, size = 0x8, scoped, tag = 'scoped memory for tpu_custom_call.1']
    #allocation6 [shape = 'u8[1024]{0}', space=vmem, size = 0x400, scoped, tag = 'output window, operand 0']
    %10 = vsyncpa [#allocation4], 0
    %s11 = scalar_lea.sflag [#allocation4], 1
    %12 = vsyncpa %s11, 0
    %13 = vsyncpa [#allocation5], 0
    %s14 = scalar_lea.sflag [#allocation5], 1
    %15 = vsyncpa %s14, 0
    loop: start=0, step=1, limit=6
    $region2: #{tpu_custom_call.1} parent=1 // loop_pre_header
      _
    $region3: #{tpu_custom_call.1} parent=1 // loop_header
      %s17 = sphi 0, %s21
      %p18 = scmp.ge.s32.totalorder %s17, 6
      %s24 = sphi 0, %s36
      %s25 = sphi 0, %s32
      %s26 = sphi 0, %s24
      %s27 = sphi 0, %s25
      %s28 = sphi 0, %s26
      %s29 = sphi 0, %s27
      %s41 = sphi 0, %s43
      %s44 = sphi 0, %s41
      %s45 = sphi 0, %s44
      %s61 = sphi 0, %s45
      %s65 = sphi 0, %s65
      %s67 = sphi 0, %s65
      %s68 = sphi 0, %s67
      %s82 = sphi 0, %s68
      %s88 = sphi 0, %s90
      %s91 = sphi 0, %s88
      %s92 = sphi 0, %s91
      %s108 = sphi 0, %s92
      %s114 = sphi 0, %s116
      %s117 = sphi 0, %s114
      %s118 = sphi 0, %s117
      %s134 = sphi 0, %s118
      %s140 = sphi 0, %s142
      %s143 = sphi 0, %s140
      %s144 = sphi 0, %s143
      %s160 = sphi 0, %s144
      %s168 = sphi 0, %s170
      %s171 = sphi 0, %s168
      %s172 = sphi 0, %s171
      %s188 = sphi 0, %s172
    $region4: #{tpu_custom_call.1} parent=1 // loop_header_branch
      %20 = sbr.rel (%p18) target = $region8
    $region5: #{tpu_custom_call.1} parent=1 // loop_body
      %s22 = ssub.s32 %s17, 1
      %s23 = ssub.s32 %s17, 2
      %s30 = sadd.s32 1, %s25
      %p31 = scmp.ge.s32.totalorder %s30, 2
      %s32 = scalar_select %p31, 0, %s30
      %s33 = sadd.s32 1, %s24
      %s34 = scalar_select %p31, %s33, %s24
      %p35 = scmp.ge.s32.totalorder %s34, 2
      %s36 = scalar_select %p35, 0, %s34
      %s37 = ssub.s32 %s24, %s36
      %s38 = ssub.s32 %s25, %s32
      %s39 = sor.u32 %s37, %s38
      %p40 = scmp.eq.s32.totalorder %s39, 0
      %s42 = sadd.s32 %s41, 1
      %s43 = scalar_select %p40, %s41, %s42
      %p46 = pneg %p40
      %p47 = scmp.eq.s32.totalorder %s17, 3
      %p48 = por %p46, %p47
      %p49 = scmp.ne.s32.totalorder %s41, %s44
      %p50 = scmp.eq.s32.totalorder %s17, 0
      %p51 = por %p49, %p50
      %p52 = scmp.ne.s32.totalorder %s41, %s44
      %p53 = scmp.eq.s32.totalorder %s22, 3
      %p54 = por %p52, %p53
      %p55 = scmp.ne.s32.totalorder %s44, %s45
      %p56 = scmp.eq.s32.totalorder %s22, 0
      %p57 = por %p55, %p56
      %p58 = scmp.ne.s32.totalorder %s44, %s45
      %p59 = scmp.eq.s32.totalorder %s23, 3
      %p60 = por %p58, %p59
      %p62 = scmp.ne.s32.totalorder %s45, %s61
      %p63 = scmp.eq.s32.totalorder %s23, 0
      %p64 = por %p62, %p63
      %s66 = sadd.s32 %s65, 1
      %p69 = scmp.eq.s32.totalorder %s17, 3
      %p70 = scmp.ne.s32.totalorder %s65, %s67
      %p71 = scmp.eq.s32.totalorder %s17, 0
      %p72 = por %p70, %p71
      %p73 = scmp.ne.s32.totalorder %s65, %s67
      %p74 = scmp.eq.s32.totalorder %s22, 3
      %p75 = por %p73, %p74
      %p76 = scmp.ne.s32.totalorder %s67, %s68
      %p77 = scmp.eq.s32.totalorder %s22, 0
      %p78 = por %p76, %p77
      %p79 = scmp.ne.s32.totalorder %s67, %s68
      %p80 = scmp.eq.s32.totalorder %s23, 3
      %p81 = por %p79, %p80
      %p83 = scmp.ne.s32.totalorder %s68, %s82
      %p84 = scmp.eq.s32.totalorder %s23, 0
      %p85 = por %p83, %p84
      %s86 = ssub.s32 %s24, %s36
      %p87 = scmp.eq.s32.totalorder %s86, 0
      %s89 = sadd.s32 %s88, 1
      %s90 = scalar_select %p87, %s88, %s89
      %p93 = pneg %p87
      %p94 = scmp.eq.s32.totalorder %s17, 3
      %p95 = por %p93, %p94
      %p96 = scmp.ne.s32.totalorder %s88, %s91
      %p97 = scmp.eq.s32.totalorder %s17, 0
      %p98 = por %p96, %p97
      %p99 = scmp.ne.s32.totalorder %s88, %s91
      %p100 = scmp.eq.s32.totalorder %s22, 3
      %p101 = por %p99, %p100
      %p102 = scmp.ne.s32.totalorder %s91, %s92
      %p103 = scmp.eq.s32.totalorder %s22, 0
      %p104 = por %p102, %p103
      %p105 = scmp.ne.s32.totalorder %s91, %s92
      %p106 = scmp.eq.s32.totalorder %s23, 3
      %p107 = por %p105, %p106
      %p109 = scmp.ne.s32.totalorder %s92, %s108
      %p110 = scmp.eq.s32.totalorder %s23, 0
      %p111 = por %p109, %p110
      %s112 = ssub.s32 %s25, %s32
      %p113 = scmp.eq.s32.totalorder %s112, 0
      %s115 = sadd.s32 %s114, 1
      %s116 = scalar_select %p113, %s114, %s115
      %p119 = pneg %p113
      %p120 = scmp.eq.s32.totalorder %s17, 3
      %p121 = por %p119, %p120
      %p122 = scmp.ne.s32.totalorder %s114, %s117
      %p123 = scmp.eq.s32.totalorder %s17, 0
      %p124 = por %p122, %p123
      %p125 = scmp.ne.s32.totalorder %s114, %s117
      %p126 = scmp.eq.s32.totalorder %s22, 3
      %p127 = por %p125, %p126
      %p128 = scmp.ne.s32.totalorder %s117, %s118
      %p129 = scmp.eq.s32.totalorder %s22, 0
      %p130 = por %p128, %p129
      %p131 = scmp.ne.s32.totalorder %s117, %s118
      %p132 = scmp.eq.s32.totalorder %s23, 3
      %p133 = por %p131, %p132
      %p135 = scmp.ne.s32.totalorder %s118, %s134
      %p136 = scmp.eq.s32.totalorder %s23, 0
      %p137 = por %p135, %p136
      %s138 = ssub.s32 %s25, %s32
      %p139 = scmp.eq.s32.totalorder %s138, 0
      %s141 = sadd.s32 %s140, 1
      %s142 = scalar_select %p139, %s140, %s141
      %p145 = pneg %p139
      %p146 = scmp.eq.s32.totalorder %s17, 3
      %p147 = por %p145, %p146
      %p148 = scmp.ne.s32.totalorder %s140, %s143
      %p149 = scmp.eq.s32.totalorder %s17, 0
      %p150 = por %p148, %p149
      %p151 = scmp.ne.s32.totalorder %s140, %s143
      %p152 = scmp.eq.s32.totalorder %s22, 3
      %p153 = por %p151, %p152
      %p154 = scmp.ne.s32.totalorder %s143, %s144
      %p155 = scmp.eq.s32.totalorder %s22, 0
      %p156 = por %p154, %p155
      %p157 = scmp.ne.s32.totalorder %s143, %s144
      %p158 = scmp.eq.s32.totalorder %s23, 3
      %p159 = por %p157, %p158
      %p161 = scmp.ne.s32.totalorder %s144, %s160
      %p162 = scmp.eq.s32.totalorder %s23, 0
      %p163 = por %p161, %p162
      %s164 = ssub.s32 %s24, %s36
      %s165 = ssub.s32 %s25, %s32
      %s166 = sor.u32 %s164, %s165
      %p167 = scmp.eq.s32.totalorder %s166, 0
      %s169 = sadd.s32 %s168, 1
      %s170 = scalar_select %p167, %s168, %s169
      %p173 = pneg %p167
      %p174 = scmp.eq.s32.totalorder %s17, 3
      %p175 = por %p173, %p174
      %p176 = scmp.ne.s32.totalorder %s168, %s171
      %p177 = scmp.eq.s32.totalorder %s17, 0
      %p178 = por %p176, %p177
      %p179 = scmp.ne.s32.totalorder %s168, %s171
      %p180 = scmp.eq.s32.totalorder %s22, 3
      %p181 = por %p179, %p180
      %p182 = scmp.ne.s32.totalorder %s171, %s172
      %p183 = scmp.eq.s32.totalorder %s22, 0
      %p184 = por %p182, %p183
      %p185 = scmp.ne.s32.totalorder %s171, %s172
      %p186 = scmp.eq.s32.totalorder %s23, 3
      %p187 = por %p185, %p186
      %p189 = scmp.ne.s32.totalorder %s172, %s188
      %p190 = scmp.eq.s32.totalorder %s23, 0
      %p191 = por %p189, %p190
      %p192 = scmp.le.s32.totalorder 1, %s17
      %p193 = scmp.lt.s32.totalorder %s17, 5
      %p194 = pnand %p192, %p193
      %p195 = pneg %p194
      // Predicated region
      $region9: #{tpu_custom_call.1} parent=5 // pred_check
        _
      $region10: #{tpu_custom_call.1} parent=5 // pred_check_branch
        %197 = sbr.rel (%p194) target = $region12
      $region11: #{tpu_custom_call.1} parent=5 // pred_region
        %s198 = ssub.s32 %s17, 1
        // Predicated region
        $region13: #{tpu_custom_call.1} parent=11 // pred_check
          %p199 = pneg %p78
        $region14: #{tpu_custom_call.1} parent=11 // pred_check_branch
          %201 = sbr.rel (%p199) target = $region16
        $region15: #{tpu_custom_call.1} parent=11 // pred_region
          _
        $region16: #{tpu_custom_call.1} parent=11 // pred_fallthru
          _
      $region12: #{tpu_custom_call.1} parent=5 // pred_fallthru
        _
      %p202 = scmp.lt.s32.totalorder %s17, 4
      // Predicated region
      $region17: #{tpu_custom_call.1} parent=5 // pred_check
        %p203 = pneg %p202
      $region18: #{tpu_custom_call.1} parent=5 // pred_check_branch
        %205 = sbr.rel (%p203) target = $region20
      $region19: #{tpu_custom_call.1} parent=5 // pred_region
        // Predicated region
        $region21: #{tpu_custom_call.1} parent=19 // pred_check
          %p206 = pneg %p51
        $region22: #{tpu_custom_call.1} parent=19 // pred_check_branch
          %208 = sbr.rel (%p206) target = $region24
        $region23: #{tpu_custom_call.1} parent=19 // pred_region
          %p209 = scmp.lt.s32.totalorder %s24, 1
          %s210 = scalar_select %p209, %s24, 1
          %p211 = scmp.lt.s32.totalorder %s25, 1
          %s212 = scalar_select %p211, %s25, 1
          %s213 = smul.addr %s210, 2
          %s214 = sadd.s32 %s212, %s213
          %s215 = smul.addr %s214, 4
          %s216 = scalar_lea.vmem %s0, %s215
        $region24: #{tpu_custom_call.1} parent=19 // pred_fallthru
          _
        // Predicated region
        $region25: #{tpu_custom_call.1} parent=19 // pred_check
          %p217 = pneg %p98
        $region26: #{tpu_custom_call.1} parent=19 // pred_check_branch
          %219 = sbr.rel (%p217) target = $region28
        $region27: #{tpu_custom_call.1} parent=19 // pred_region
          %s220 = sand.u32 %s88, 1
          %s221 = scalar_lea.sflag [#allocation4], %s220
          %s222 = sand.u32 %s88, 1
          %s223 = smul.addr %s222, 8
          %s224 = scalar_lea.vmem [#allocation3], %s223
          %s226 = ssub.s32 128, 128
          %227 = vsyncadd %s221, %s226
          %s228 = smul.addr %s24, 2
          %s229 = smul.addr %s228, 64
          %s230 = scalar_lea.hbm %s2, %s229
          %s231 = sshll.u32 %s224, 4
          %s232 = int_to_ptr.vmem [resolvable:$true] %s231
          %237 = dma.hbm_to_vmem [thread:$0]  %s230, 128, %s232, %s221, 64, 64, 4
        $region28: #{tpu_custom_call.1} parent=19 // pred_fallthru
          _
        // Predicated region
        $region29: #{tpu_custom_call.1} parent=19 // pred_check
          %p238 = pneg %p124
        $region30: #{tpu_custom_call.1} parent=19 // pred_check_branch
          %240 = sbr.rel (%p238) target = $region32
        $region31: #{tpu_custom_call.1} parent=19 // pred_region
          %p241 = scmp.lt.s32.totalorder %s25, 1
          %s242 = scalar_select %p241, %s25, 1
          %s243 = smul.addr %s242, 8
          %s244 = scalar_lea.vmem %s3, %s243
        $region32: #{tpu_custom_call.1} parent=19 // pred_fallthru
          _
        // Predicated region
        $region33: #{tpu_custom_call.1} parent=19 // pred_check
          %p245 = pneg %p150
        $region34: #{tpu_custom_call.1} parent=19 // pred_check_branch
          %247 = sbr.rel (%p245) target = $region36
        $region35: #{tpu_custom_call.1} parent=19 // pred_region
          %p248 = scmp.lt.s32.totalorder %s25, 1
          %s249 = scalar_select %p248, %s25, 1
          %s250 = smul.addr %s249, 8
          %s251 = scalar_lea.vmem %s4, %s250
        $region36: #{tpu_custom_call.1} parent=19 // pred_fallthru
          _
      $region20: #{tpu_custom_call.1} parent=5 // pred_fallthru
        _
      %p252 = scmp.le.s32.totalorder 1, %s17
      %p253 = scmp.lt.s32.totalorder %s17, 5
      %p254 = pnand %p252, %p253
      %p255 = pneg %p254
      // Predicated region
      $region37: #{tpu_custom_call.1} parent=5 // pred_check
        _
      $region38: #{tpu_custom_call.1} parent=5 // pred_check_branch
        %257 = sbr.rel (%p254) target = $region40
      $region39: #{tpu_custom_call.1} parent=5 // pred_region
        %s258 = ssub.s32 %s17, 1
        %s259 = sand.u32 %s91, 1
        %s260 = scalar_lea.sflag [#allocation4], %s259
        %s261 = sand.u32 %s91, 1
        %s262 = smul.addr %s261, 8
        %s263 = scalar_lea.vmem [#allocation3], %s262
        // Predicated region
        $region41: #{tpu_custom_call.1} parent=39 // pred_check
          %p264 = pneg %p104
        $region42: #{tpu_custom_call.1} parent=39 // pred_check_branch
          %266 = sbr.rel (%p264) target = $region44
        $region43: #{tpu_custom_call.1} parent=39 // pred_region
          %267 = dma.done %s260, 128
        $region44: #{tpu_custom_call.1} parent=39 // pred_fallthru
          _
        %p268 = scmp.lt.s32.totalorder %s26, 1
        %s269 = scalar_select %p268, %s26, 1
        %p270 = scmp.lt.s32.totalorder %s27, 1
        %s271 = scalar_select %p270, %s27, 1
        %s272 = smul.addr %s269, 2
        %s273 = sadd.s32 %s271, %s272
        %s274 = smul.addr %s273, 4
        %s275 = scalar_lea.vmem %s0, %s274
        %p276 = pneg %p57
        %p277 = pneg %p54
        %p278 = pneg %p78
        %p279 = pneg %p75
        %s280 = sand.u32 %s91, 1
        %s281 = scalar_lea.sflag [#allocation4], %s280
        %s282 = sand.u32 %s91, 1
        %s283 = smul.addr %s282, 8
        %s284 = scalar_lea.vmem [#allocation3], %s283
        %p285 = pneg %p104
        %p286 = pneg %p101
        %p287 = scmp.lt.s32.totalorder %s27, 1
        %s288 = scalar_select %p287, %s27, 1
        %s289 = smul.addr %s288, 8
        %s290 = scalar_lea.vmem %s3, %s289
        %p291 = pneg %p130
        %p292 = pneg %p127
        %p293 = scmp.lt.s32.totalorder %s27, 1
        %s294 = scalar_select %p293, %s27, 1
        %s295 = smul.addr %s294, 8
        %s296 = scalar_lea.vmem %s4, %s295
        %p297 = pneg %p156
        %p298 = pneg %p153
        %p299 = pneg %p184
        %p300 = pneg %p181
        %s301 = sand.u32 %s171, 1
        %s302 = scalar_lea.sflag [#allocation5], %s301
        %s303 = sand.u32 %s171, 1
        %s304 = scalar_lea.vmem [#allocation6], %s303
        %p305 = scmp.lt.s32.totalorder %s26, 1
        %s306 = scalar_select %p305, %s26, 1
        %p307 = scmp.lt.s32.totalorder %s27, 1
        %s308 = scalar_select %p307, %s27, 1
        %s309 = smul.addr %s306, 2
        %s310 = sadd.s32 %s308, %s309
        %s311 = smul.addr %s310, 4
        %s312 = scalar_lea.vmem %s0, %s311
        %p313 = scmp.lt.s32.totalorder %s27, 1
        %s314 = scalar_select %p313, %s27, 1
        %s315 = smul.addr %s314, 8
        %s316 = scalar_lea.vmem %s3, %s315
        %p317 = scmp.lt.s32.totalorder %s27, 1
        %s318 = scalar_select %p317, %s27, 1
        %s319 = smul.addr %s318, 8
        %s320 = scalar_lea.vmem %s4, %s319
        %v322 = vld [vmem:[%s312] sm:$0xf]
        %v323 = vld [vmem:[%s1] sm:$0xf]
        %v324 = vld [vmem:[%s1 + $0x4] sm:$0xf]
        %v325 = vld [vmem:[%s1 + $0x8] sm:$0xf]
        %v326 = vld [vmem:[%s1 + $0xc] sm:$0xf]
        %v331 = vunpack.c.l.b16 %v323
        %v332 = vunpack.c.l.b16 %v324
        %v333 = vunpack.c.l.b16 %v325
        %v334 = vunpack.c.l.b16 %v326
        %v335 = vpack.c.b16 %v332, %v331
        %v336 = vpack.c.b16 %v334, %v333
        %vm339 = vcmask 261120
        %v341 = vsel %vm339, %v322, 0
        %343 = vmatprep.subr.bf16.mxu0 0
        %344 = vmatpush1.bf16.msra.mxu0 %v335
        %345 = vmatprep.subr.bf16.mxu0 0
        %346 = vmatpush1.bf16.msra.mxu0 %v336
        %347 = vmatprep.subr.bf16.mxu0 0
        %348 = vmatpush1.bf16.msra.mxu0 0
        %349 = vmatprep.subr.bf16.mxu0 0
        %350 = vmatpush1.bf16.msra.mxu0 0
        %351 = vmatprep.subr.bf16.mxu0 0
        %352 = vmatpush1.bf16.msra.mxu0 0
        %353 = vmatprep.subr.bf16.mxu0 0
        %354 = vmatpush1.bf16.msra.mxu0 0
        %355 = vmatprep.subr.bf16.mxu0 0
        %356 = vmatpush1.bf16.msra.mxu0 0
        %357 = vmatprep.subr.bf16.mxu0 0
        %358 = vmatpush1.bf16.msra.mxu0 0
        %359 = vmatprep.subr.bf16.mxu0 0
        %360 = vmatpush1.bf16.msra.mxu0 0
        %361 = vmatprep.subr.bf16.mxu0 0
        %362 = vmatpush1.bf16.msra.mxu0 0
        %363 = vmatprep.subr.bf16.mxu0 0
        %364 = vmatpush1.bf16.msra.mxu0 0
        %365 = vmatprep.subr.bf16.mxu0 0
        %366 = vmatpush1.bf16.msra.mxu0 0
        %367 = vmatprep.subr.bf16.mxu0 0
        %368 = vmatpush1.bf16.msra.mxu0 0
        %369 = vmatprep.subr.bf16.mxu0 0
        %370 = vmatpush1.bf16.msra.mxu0 0
        %371 = vmatprep.subr.bf16.mxu0 0
        %372 = vmatpush1.bf16.msra.mxu0 0
        %373 = vmatprep.subr.bf16.mxu0 0
        %374 = vmatpush1.bf16.msra.mxu0 0
        %375 = vmatprep.mubr.bf16.mxu0 0
        %376 = vmatmul.mubr.bf16.gmra.mrb[0].mxu0 %v341
        %v377 = vpop.f32.mrb[0].mxu0
        %v378 = vadd.f32 0.0, %v377
        %v379 = vpop.f32.mrb[0].mxu0
        %v380 = vpop.f32.mrb[0].mxu0
        %v381 = vpop.f32.mrb[0].mxu0
        %382 = vdwg.mxu0
        %v383 = vld [vmem:[%s316] sm:$0xff]
        %v384 = vld [vmem:[%s320] sm:$0xff]
        %s385 = smul.u32 %s27, 8
        %v386 = vlaneseq
        %v387 = vshrl.u32 %v386, 7
        %v388 = vstv %s385
        %v389 = vadd.s32 %v388, %v387
        %vm390 = vcmp.lt.s32.totalorder %v389, 16
        %v391 = vsel %vm390, 1, 0
        %v392 = vcvt.s32.f32 %v391
        %v393 = vmul.f32 %v378, %v383
        %395 = vrot.lane.b32.xlu0 %v384, 4
        %v396 = vpop.permute.xlu0 %395
        %v398 = vmul.f32 %v378, %v396
        %400 = vrot.lane.b32.xlu0 %v398, 124
        %v401 = vpop.permute.xlu0 %400
        %v403 = vsub.f32 %v393, %v401
        %v404 = vpack.c.bf16 %v403, %v403
        %vm405 = vcmask 27648
        %406 = vst.msk [vmem:[#allocation2] sm:$0xf] %vm405, %v404
        %408 = vrot.lane.b32.xlu0 %v383, 4
        %v409 = vpop.permute.xlu0 %408
        %v411 = vmul.f32 %v378, %v409
        %v412 = vmul.f32 %v378, %v384
        %414 = vrot.lane.b32.xlu0 %v412, 4
        %v415 = vpop.permute.xlu0 %414
        %v417 = vadd.f32 %v411, %v415
        %v418 = vpack.c.bf16 %v417, %v417
        %vm419 = vcmask 60448
        %420 = vst.msk [vmem:[#allocation2] sm:$0xf] %vm419, %v418
        %v421 = vld [vmem:[%s263] sm:$0xf]
        %v422 = vld [vmem:[%s263 + $0x4] sm:$0xf]
        %v423 = vld [vmem:[#allocation2] sm:$0xf]
        %v426 = vunpack.c.l.b16 %v421
        %v427 = vunpack.c.l.b16 %v422
        %v428 = vpack.c.b16 %v427, %v426
        %vm429 = vcmask 64512
        %v431 = vsel %vm429, %v423, 0
        %v434 = vsel %vm429, %v428, 0
        %436 = vmatprep.subr.bf16.mxu0 0
        %437 = vmatpush1.bf16.xpose.msra.mxu0 %v434
        %438 = vmatprep.subr.bf16.mxu0 0
        %439 = vmatpush1.bf16.xpose.msra.mxu0 0
        %440 = vmatprep.subr.bf16.mxu0 0
        %441 = vmatpush1.bf16.xpose.msra.mxu0 0
        %442 = vmatprep.subr.bf16.mxu0 0
        %443 = vmatpush1.bf16.xpose.msra.mxu0 0
        %444 = vmatprep.subr.bf16.mxu0 0
        %445 = vmatpush1.bf16.xpose.msra.mxu0 0
        %446 = vmatprep.subr.bf16.mxu0 0
        %447 = vmatpush1.bf16.xpose.msra.mxu0 0
        %448 = vmatprep.subr.bf16.mxu0 0
        %449 = vmatpush1.bf16.xpose.msra.mxu0 0
        %450 = vmatprep.subr.bf16.mxu0 0
        %451 = vmatpush1.bf16.xpose.msra.mxu0 0
        %452 = vmatprep.subr.bf16.mxu0 0
        %453 = vmatpush1.bf16.xpose.msra.mxu0 0
        %454 = vmatprep.subr.bf16.mxu0 0
        %455 = vmatpush1.bf16.xpose.msra.mxu0 0
        %456 = vmatprep.subr.bf16.mxu0 0
        %457 = vmatpush1.bf16.xpose.msra.mxu0 0
        %458 = vmatprep.subr.bf16.mxu0 0
        %459 = vmatpush1.bf16.xpose.msra.mxu0 0
        %460 = vmatprep.subr.bf16.mxu0 0
        %461 = vmatpush1.bf16.xpose.msra.mxu0 0
        %462 = vmatprep.subr.bf16.mxu0 0
        %463 = vmatpush1.bf16.xpose.msra.mxu0 0
        %464 = vmatprep.subr.bf16.mxu0 0
        %465 = vmatpush1.bf16.xpose.msra.mxu0 0
        %466 = vmatprep.subr.bf16.mxu0 0
        %467 = vmatpush1.bf16.xpose.msra.mxu0 0
        %468 = vmatprep.mubr.bf16.mxu0 0
        %469 = vmatmul.mubr.bf16.gmra.mrb[0].mxu0 %v431
        %v470 = vpop.f32.mrb[0].mxu0
        %v471 = vadd.f32 0.0, %v470
        %v472 = vpop.f32.mrb[0].mxu0
        %v473 = vpop.f32.mrb[0].mxu0
        %v474 = vpop.f32.mrb[0].mxu0
        %475 = vdwg.mxu0
        %vm476 = vcmask 130048
        %v477 = vsel %vm476, %v471, -inf
        %478 = vmax.xlane.f32.xlu0 %v477
        %v479 = vpop.xlane.xlu0 %478
        %v480 = vsub.f32 %v471, %v479
        %v481 = vpack.c.bf16 %v480, %v480
        %v483 = vmul.bf16 %v481, 1069105081
        %v484 = vpow.bf16.pop %v483
        %v485 = vunpack.c.l.bf16 %v484
        %v486 = vsel %vm476, %v485, 0.0
        %487 = vadd.xlane.f32.xlu0 %v486
        %v488 = vpop.xlane.xlu0 %487
        %v489 = vrcp.pop %v488
        %v490 = vmul.f32 %v489, %v392
        %v491 = vmul.f32 %v485, %v490
        %v492 = vsel %vm476, %v491, 0.0
        %v493 = vrot.slane %v492, 4
        %v494 = vadd.f32 %v492, %v493
        %v495 = vrot.slane %v494, 2
        %v496 = vadd.f32 %v494, %v495
        %v497 = vrot.slane %v496, 1
        %v498 = vadd.f32 %v496, %v497
        %v499 = vadd.f32 %v498, 0.0
        %500 = vrot.lane.b32.xlu0 %v383, 8
        %v501 = vpop.permute.xlu0 %500
        %v503 = vmul.f32 %v378, %v501
        %504 = vrot.lane.b32.xlu0 %v384, 12
        %v505 = vpop.permute.xlu0 %504
        %v507 = vmul.f32 %v378, %v505
        %509 = vrot.lane.b32.xlu0 %v507, 124
        %v510 = vpop.permute.xlu0 %509
        %v512 = vsub.f32 %v503, %v510
        %v513 = vpack.c.bf16 %v512, %v512
        %v515 = vunpack.c.l.b16 %v513
        %v516 = vpack.c.b16 %v515, %v515
        %517 = vrot.lane.b32.xlu0 %v516, 120
        %v518 = vpop.permute.xlu0 %517
        %520 = vst.msk [vmem:[#allocation2] sm:$0xf] %vm405, %v518
        %521 = vrot.lane.b32.xlu0 %v383, 12
        %v522 = vpop.permute.xlu0 %521
        %v524 = vmul.f32 %v378, %v522
        %525 = vrot.lane.b32.xlu0 %v384, 8
        %v526 = vpop.permute.xlu0 %525
        %v528 = vmul.f32 %v378, %v526
        %530 = vrot.lane.b32.xlu0 %v528, 4
        %v531 = vpop.permute.xlu0 %530
        %v533 = vadd.f32 %v524, %v531
        %v534 = vpack.c.bf16 %v533, %v533
        %v536 = vunpack.c.l.b16 %v534
        %v537 = vpack.c.b16 %v536, %v536
        %538 = vrot.lane.b32.xlu0 %v537, 120
        %v539 = vpop.permute.xlu0 %538
        %541 = vst.msk [vmem:[#allocation2] sm:$0xf] %vm419, %v539
        %v542 = vld [vmem:[%s263] sm:$0xf]
        %v543 = vld [vmem:[%s263 + $0x4] sm:$0xf]
        %v544 = vld [vmem:[#allocation2] sm:$0xf]
        %v547 = vunpack.c.l.b16 %v542
        %v548 = vunpack.c.l.b16 %v543
        %v549 = vpack.c.b16 %v548, %v547
        %v551 = vsel %vm429, %v544, 0
        %v554 = vsel %vm429, %v549, 0
        %556 = vmatprep.subr.bf16.mxu0 0
        %557 = vmatpush1.bf16.xpose.msra.mxu0 %v554
        %558 = vmatprep.subr.bf16.mxu0 0
        %559 = vmatpush1.bf16.xpose.msra.mxu0 0
        %560 = vmatprep.subr.bf16.mxu0 0
        %561 = vmatpush1.bf16.xpose.msra.mxu0 0
        %562 = vmatprep.subr.bf16.mxu0 0
        %563 = vmatpush1.bf16.xpose.msra.mxu0 0
        %564 = vmatprep.subr.bf16.mxu0 0
        %565 = vmatpush1.bf16.xpose.msra.mxu0 0
        %566 = vmatprep.subr.bf16.mxu0 0
        %567 = vmatpush1.bf16.xpose.msra.mxu0 0
        %568 = vmatprep.subr.bf16.mxu0 0
        %569 = vmatpush1.bf16.xpose.msra.mxu0 0
        %570 = vmatprep.subr.bf16.mxu0 0
        %571 = vmatpush1.bf16.xpose.msra.mxu0 0
        %572 = vmatprep.subr.bf16.mxu0 0
        %573 = vmatpush1.bf16.xpose.msra.mxu0 0
        %574 = vmatprep.subr.bf16.mxu0 0
        %575 = vmatpush1.bf16.xpose.msra.mxu0 0
        %576 = vmatprep.subr.bf16.mxu0 0
        %577 = vmatpush1.bf16.xpose.msra.mxu0 0
        %578 = vmatprep.subr.bf16.mxu0 0
        %579 = vmatpush1.bf16.xpose.msra.mxu0 0
        %580 = vmatprep.subr.bf16.mxu0 0
        %581 = vmatpush1.bf16.xpose.msra.mxu0 0
        %582 = vmatprep.subr.bf16.mxu0 0
        %583 = vmatpush1.bf16.xpose.msra.mxu0 0
        %584 = vmatprep.subr.bf16.mxu0 0
        %585 = vmatpush1.bf16.xpose.msra.mxu0 0
        %586 = vmatprep.subr.bf16.mxu0 0
        %587 = vmatpush1.bf16.xpose.msra.mxu0 0
        %588 = vmatprep.mubr.bf16.mxu0 0
        %589 = vmatmul.mubr.bf16.gmra.mrb[0].mxu0 %v551
        %v590 = vpop.f32.mrb[0].mxu0
        %v591 = vadd.f32 0.0, %v590
        %v592 = vpop.f32.mrb[0].mxu0
        %v593 = vpop.f32.mrb[0].mxu0
        %v594 = vpop.f32.mrb[0].mxu0
        %595 = vdwg.mxu0
        %v596 = vsel %vm476, %v591, -inf
        %597 = vmax.xlane.f32.xlu0 %v596
        %v598 = vpop.xlane.xlu0 %597
        %v599 = vsub.f32 %v591, %v598
        %v600 = vpack.c.bf16 %v599, %v599
        %v602 = vmul.bf16 %v600, 1069105081
        %v603 = vpow.bf16.pop %v602
        %v604 = vunpack.c.l.bf16 %v603
        %v605 = vsel %vm476, %v604, 0.0
        %606 = vadd.xlane.f32.xlu0 %v605
        %v607 = vpop.xlane.xlu0 %606
        %v608 = vrcp.pop %v607
        %v609 = vmul.f32 %v608, %v392
        %v610 = vmul.f32 %v604, %v609
        %v611 = vsel %vm476, %v610, 0.0
        %v612 = vrot.slane %v611, 4
        %v613 = vadd.f32 %v611, %v612
        %v614 = vrot.slane %v613, 2
        %v615 = vadd.f32 %v613, %v614
        %v616 = vrot.slane %v615, 1
        %v617 = vadd.f32 %v615, %v616
        %v618 = vadd.f32 %v499, %v617
        %619 = vrot.lane.b32.xlu0 %v383, 16
        %v620 = vpop.permute.xlu0 %619
        %v622 = vmul.f32 %v378, %v620
        %623 = vrot.lane.b32.xlu0 %v384, 20
        %v624 = vpop.permute.xlu0 %623
        %v626 = vmul.f32 %v378, %v624
        %628 = vrot.lane.b32.xlu0 %v626, 124
        %v629 = vpop.permute.xlu0 %628
        %v631 = vsub.f32 %v622, %v629
        %v632 = vpack.c.bf16 %v631, %v631
        %v634 = vunpack.c.l.b16 %v632
        %v635 = vpack.c.b16 %v634, %v634
        %636 = vrot.lane.b32.xlu0 %v635, 112
        %v637 = vpop.permute.xlu0 %636
        %639 = vst.msk [vmem:[#allocation2] sm:$0xf] %vm405, %v637
        %640 = vrot.lane.b32.xlu0 %v383, 20
        %v641 = vpop.permute.xlu0 %640
        %v643 = vmul.f32 %v378, %v641
        %644 = vrot.lane.b32.xlu0 %v384, 16
        %v645 = vpop.permute.xlu0 %644
        %v647 = vmul.f32 %v378, %v645
        %649 = vrot.lane.b32.xlu0 %v647, 4
        %v650 = vpop.permute.xlu0 %649
        %v652 = vadd.f32 %v643, %v650
        %v653 = vpack.c.bf16 %v652, %v652
        %v655 = vunpack.c.l.b16 %v653
        %v656 = vpack.c.b16 %v655, %v655
        %657 = vrot.lane.b32.xlu0 %v656, 112
        %v658 = vpop.permute.xlu0 %657
        %660 = vst.msk [vmem:[#allocation2] sm:$0xf] %vm419, %v658
        %v661 = vld [vmem:[%s263] sm:$0xf]
        %v662 = vld [vmem:[%s263 + $0x4] sm:$0xf]
        %v663 = vld [vmem:[#allocation2] sm:$0xf]
        %v666 = vunpack.c.l.b16 %v661
        %v667 = vunpack.c.l.b16 %v662
        %v668 = vpack.c.b16 %v667, %v666
        %669 = vrot.lane.b32.xlu0 %v668, 120
        %v670 = vpop.permute.xlu0 %669
        %v672 = vsel %vm429, %v663, 0
        %v675 = vsel %vm429, %v670, 0
        %677 = vmatprep.subr.bf16.mxu0 0
        %678 = vmatpush1.bf16.xpose.msra.mxu0 %v675
        %679 = vmatprep.subr.bf16.mxu0 0
        %680 = vmatpush1.bf16.xpose.msra.mxu0 0
        %681 = vmatprep.subr.bf16.mxu0 0
        %682 = vmatpush1.bf16.xpose.msra.mxu0 0
        %683 = vmatprep.subr.bf16.mxu0 0
        %684 = vmatpush1.bf16.xpose.msra.mxu0 0
        %685 = vmatprep.subr.bf16.mxu0 0
        %686 = vmatpush1.bf16.xpose.msra.mxu0 0
        %687 = vmatprep.subr.bf16.mxu0 0
        %688 = vmatpush1.bf16.xpose.msra.mxu0 0
        %689 = vmatprep.subr.bf16.mxu0 0
        %690 = vmatpush1.bf16.xpose.msra.mxu0 0
        %691 = vmatprep.subr.bf16.mxu0 0
        %692 = vmatpush1.bf16.xpose.msra.mxu0 0
        %693 = vmatprep.subr.bf16.mxu0 0
        %694 = vmatpush1.bf16.xpose.msra.mxu0 0
        %695 = vmatprep.subr.bf16.mxu0 0
        %696 = vmatpush1.bf16.xpose.msra.mxu0 0
        %697 = vmatprep.subr.bf16.mxu0 0
        %698 = vmatpush1.bf16.xpose.msra.mxu0 0
        %699 = vmatprep.subr.bf16.mxu0 0
        %700 = vmatpush1.bf16.xpose.msra.mxu0 0
        %701 = vmatprep.subr.bf16.mxu0 0
        %702 = vmatpush1.bf16.xpose.msra.mxu0 0
        %703 = vmatprep.subr.bf16.mxu0 0
        %704 = vmatpush1.bf16.xpose.msra.mxu0 0
        %705 = vmatprep.subr.bf16.mxu0 0
        %706 = vmatpush1.bf16.xpose.msra.mxu0 0
        %707 = vmatprep.subr.bf16.mxu0 0
        %708 = vmatpush1.bf16.xpose.msra.mxu0 0
        %709 = vmatprep.mubr.bf16.mxu0 0
        %710 = vmatmul.mubr.bf16.gmra.mrb[0].mxu0 %v672
        %v711 = vpop.f32.mrb[0].mxu0
        %v712 = vadd.f32 0.0, %v711
        %v713 = vpop.f32.mrb[0].mxu0
        %v714 = vpop.f32.mrb[0].mxu0
        %v715 = vpop.f32.mrb[0].mxu0
        %716 = vdwg.mxu0
        %v717 = vsel %vm476, %v712, -inf
        %718 = vmax.xlane.f32.xlu0 %v717
        %v719 = vpop.xlane.xlu0 %718
        %v720 = vsub.f32 %v712, %v719
        %v721 = vpack.c.bf16 %v720, %v720
        %v723 = vmul.bf16 %v721, 1069105081
        %v724 = vpow.bf16.pop %v723
        %v725 = vunpack.c.l.bf16 %v724
        %v726 = vsel %vm476, %v725, 0.0
        %727 = vadd.xlane.f32.xlu0 %v726
        %v728 = vpop.xlane.xlu0 %727
        %v729 = vrcp.pop %v728
        %v730 = vmul.f32 %v729, %v392
        %v731 = vmul.f32 %v725, %v730
        %v732 = vsel %vm476, %v731, 0.0
        %v733 = vrot.slane %v732, 4
        %v734 = vadd.f32 %v732, %v733
        %v735 = vrot.slane %v734, 2
        %v736 = vadd.f32 %v734, %v735
        %v737 = vrot.slane %v736, 1
        %v738 = vadd.f32 %v736, %v737
        %v739 = vadd.f32 %v618, %v738
        %740 = vrot.lane.b32.xlu0 %v383, 24
        %v741 = vpop.permute.xlu0 %740
        %v743 = vmul.f32 %v378, %v741
        %744 = vrot.lane.b32.xlu0 %v384, 28
        %v745 = vpop.permute.xlu0 %744
        %v747 = vmul.f32 %v378, %v745
        %749 = vrot.lane.b32.xlu0 %v747, 124
        %v750 = vpop.permute.xlu0 %749
        %v752 = vsub.f32 %v743, %v750
        %v753 = vpack.c.bf16 %v752, %v752
        %v755 = vunpack.c.l.b16 %v753
        %v756 = vpack.c.b16 %v755, %v755
        %757 = vrot.lane.b32.xlu0 %v756, 104
        %v758 = vpop.permute.xlu0 %757
        %760 = vst.msk [vmem:[#allocation2] sm:$0xf] %vm405, %v758
        %761 = vrot.lane.b32.xlu0 %v383, 28
        %v762 = vpop.permute.xlu0 %761
        %v764 = vmul.f32 %v378, %v762
        %765 = vrot.lane.b32.xlu0 %v384, 24
        %v766 = vpop.permute.xlu0 %765
        %v768 = vmul.f32 %v378, %v766
        %770 = vrot.lane.b32.xlu0 %v768, 4
        %v771 = vpop.permute.xlu0 %770
        %v773 = vadd.f32 %v764, %v771
        %v774 = vpack.c.bf16 %v773, %v773
        %v776 = vunpack.c.l.b16 %v774
        %v777 = vpack.c.b16 %v776, %v776
        %778 = vrot.lane.b32.xlu0 %v777, 104
        %v779 = vpop.permute.xlu0 %778
        %781 = vst.msk [vmem:[#allocation2] sm:$0xf] %vm419, %v779
        %v782 = vld [vmem:[%s263] sm:$0xf]
        %v783 = vld [vmem:[%s263 + $0x4] sm:$0xf]
        %v784 = vld [vmem:[#allocation2] sm:$0xf]
        %v787 = vunpack.c.l.b16 %v782
        %v788 = vunpack.c.l.b16 %v783
        %v789 = vpack.c.b16 %v788, %v787
        %790 = vrot.lane.b32.xlu0 %v789, 120
        %v791 = vpop.permute.xlu0 %790
        %v793 = vsel %vm429, %v784, 0
        %v796 = vsel %vm429, %v791, 0
        %798 = vmatprep.subr.bf16.mxu0 0
        %799 = vmatpush1.bf16.xpose.msra.mxu0 %v796
        %800 = vmatprep.subr.bf16.mxu0 0
        %801 = vmatpush1.bf16.xpose.msra.mxu0 0
        %802 = vmatprep.subr.bf16.mxu0 0
        %803 = vmatpush1.bf16.xpose.msra.mxu0 0
        %804 = vmatprep.subr.bf16.mxu0 0
        %805 = vmatpush1.bf16.xpose.msra.mxu0 0
        %806 = vmatprep.subr.bf16.mxu0 0
        %807 = vmatpush1.bf16.xpose.msra.mxu0 0
        %808 = vmatprep.subr.bf16.mxu0 0
        %809 = vmatpush1.bf16.xpose.msra.mxu0 0
        %810 = vmatprep.subr.bf16.mxu0 0
        %811 = vmatpush1.bf16.xpose.msra.mxu0 0
        %812 = vmatprep.subr.bf16.mxu0 0
        %813 = vmatpush1.bf16.xpose.msra.mxu0 0
        %814 = vmatprep.subr.bf16.mxu0 0
        %815 = vmatpush1.bf16.xpose.msra.mxu0 0
        %816 = vmatprep.subr.bf16.mxu0 0
        %817 = vmatpush1.bf16.xpose.msra.mxu0 0
        %818 = vmatprep.subr.bf16.mxu0 0
        %819 = vmatpush1.bf16.xpose.msra.mxu0 0
        %820 = vmatprep.subr.bf16.mxu0 0
        %821 = vmatpush1.bf16.xpose.msra.mxu0 0
        %822 = vmatprep.subr.bf16.mxu0 0
        %823 = vmatpush1.bf16.xpose.msra.mxu0 0
        %824 = vmatprep.subr.bf16.mxu0 0
        %825 = vmatpush1.bf16.xpose.msra.mxu0 0
        %826 = vmatprep.subr.bf16.mxu0 0
        %827 = vmatpush1.bf16.xpose.msra.mxu0 0
        %828 = vmatprep.subr.bf16.mxu0 0
        %829 = vmatpush1.bf16.xpose.msra.mxu0 0
        %830 = vmatprep.mubr.bf16.mxu0 0
        %831 = vmatmul.mubr.bf16.gmra.mrb[0].mxu0 %v793
        %v832 = vpop.f32.mrb[0].mxu0
        %v833 = vadd.f32 0.0, %v832
        %v834 = vpop.f32.mrb[0].mxu0
        %v835 = vpop.f32.mrb[0].mxu0
        %v836 = vpop.f32.mrb[0].mxu0
        %837 = vdwg.mxu0
        %v838 = vsel %vm476, %v833, -inf
        %839 = vmax.xlane.f32.xlu0 %v838
        %v840 = vpop.xlane.xlu0 %839
        %v841 = vsub.f32 %v833, %v840
        %v842 = vpack.c.bf16 %v841, %v841
        %v844 = vmul.bf16 %v842, 1069105081
        %v845 = vpow.bf16.pop %v844
        %v846 = vunpack.c.l.bf16 %v845
        %v847 = vsel %vm476, %v846, 0.0
        %848 = vadd.xlane.f32.xlu0 %v847
        %v849 = vpop.xlane.xlu0 %848
        %v850 = vrcp.pop %v849
        %v851 = vmul.f32 %v850, %v392
        %v852 = vmul.f32 %v846, %v851
        %v853 = vsel %vm476, %v852, 0.0
        %v854 = vrot.slane %v853, 4
        %v855 = vadd.f32 %v853, %v854
        %v856 = vrot.slane %v855, 2
        %v857 = vadd.f32 %v855, %v856
        %v858 = vrot.slane %v857, 1
        %v859 = vadd.f32 %v857, %v858
        %v860 = vadd.f32 %v739, %v859
        %v861 = vmul.f32 %v860, 0.015625
        %vm862 = vcmask 122880
        %863 = vst.msk [vmem:[%s304] sm:$0x1] %vm862, %v861
        %s864 = sand.u32 %s171, 1
        %s865 = scalar_lea.sflag [#allocation5], %s864
        %s866 = sand.u32 %s171, 1
        %s867 = scalar_lea.vmem [#allocation6], %s866
        // Predicated region
        $region45: #{tpu_custom_call.1} parent=39 // pred_check
          %p868 = pneg %p181
        $region46: #{tpu_custom_call.1} parent=39 // pred_check_branch
          %870 = sbr.rel (%p868) target = $region48
        $region47: #{tpu_custom_call.1} parent=39 // pred_region
          %s872 = ssub.s32 16, 16
          %873 = vsyncadd %s865, %s872
          %s874 = smul.addr %s26, 2
          %s875 = sadd.s32 %s27, %s874
          %s876 = smul.addr %s875, 16
          %s877 = scalar_lea.hbm %s5, %s876
          %s879 = sshll.u32 %s867, 4
          %s880 = int_to_ptr.vmem [resolvable:$true] %s879
          %882 = dma.vmem_to_hbm [thread:$0]  %s880, 16, %s877, %s865
        $region48: #{tpu_custom_call.1} parent=39 // pred_fallthru
          _
      $region40: #{tpu_custom_call.1} parent=5 // pred_fallthru
        _
      %p883 = scmp.le.s32.totalorder 2, %s17
      // Predicated region
      $region49: #{tpu_custom_call.1} parent=5 // pred_check
        %p884 = pneg %p883
      $region50: #{tpu_custom_call.1} parent=5 // pred_check_branch
        %886 = sbr.rel (%p884) target = $region52
      $region51: #{tpu_custom_call.1} parent=5 // pred_region
        %s887 = ssub.s32 %s17, 2
        // Predicated region
        $region53: #{tpu_custom_call.1} parent=51 // pred_check
          %p888 = pneg %p187
        $region54: #{tpu_custom_call.1} parent=51 // pred_check_branch
          %890 = sbr.rel (%p888) target = $region56
        $region55: #{tpu_custom_call.1} parent=51 // pred_region
          %s891 = sand.u32 %s172, 1
          %s892 = scalar_lea.sflag [#allocation5], %s891
          %s893 = sand.u32 %s172, 1
          %s894 = scalar_lea.vmem [#allocation6], %s893
          %895 = dma.done %s892, 16
        $region56: #{tpu_custom_call.1} parent=51 // pred_fallthru
          _
      $region52: #{tpu_custom_call.1} parent=5 // pred_fallthru
        _
    $region6: #{tpu_custom_call.1} parent=1 // loop_footer
      %s21 = sadd.s32 1, %s17
    $region7: #{tpu_custom_call.1} parent=1 // loop_footer_branch
      %16 = sbr.rel target = $region3
    $region8: #{tpu_custom_call.1} parent=1 // loop_exit
      _
    %896 = vsyncpa [#allocation4], 1
    %s897 = scalar_lea.sflag [#allocation4], 1
    %898 = vsyncpa %s897, 1
    %899 = vsyncpa [#allocation5], 1
    %s900 = scalar_lea.sflag [#allocation5], 1
    %901 = vsyncpa %s900, 1

</llo_original>
